<compile_context>
chip_gen: v5e
topology: v5e:2x2
jax: 0.10.0
libtpu: 0.0.40
codegen_flags: <defaults>
</compile_context>

<pallas_src>
import functools
import math

import jax
import jax.numpy as jnp
from jax.experimental import pallas as pl
from jax.experimental.pallas import tpu as pltpu


def _pick_tile(n, target):
    """Largest tile <= target that divides n and is a multiple of 16
    (bf16 sublane tiling); falls back to the full extent."""
    if n <= target:
        return n
    for t in range(target, 15, -1):
        if n % t == 0 and t % 16 == 0:
            return t
    return n


def _qkv_proj_kernel(xq_ref, xk_ref, xv_ref,
                     wq_ref, bq_ref, wk_ref, bk_ref, wv_ref, bv_ref,
                     q_ref, k_ref, v_ref):
    """Fused Q/K/V projections for one (batch, row-tile) block.

    x*_ref : (1, TM, D) bf16 activations
    w*_ref : (D, D)     bf16 weights, (in, out) layout
    b*_ref : (1, D)     f32 biases
    outs   : (1, TM, D) bf16
    """
    def proj(x_ref, w_ref, b_ref, o_ref):
        acc = jnp.dot(x_ref[0], w_ref[...],
                      preferred_element_type=jnp.float32) + b_ref[0]
        o_ref[0] = acc.astype(o_ref.dtype)

    # TODO(synk): when query is key is value (self-attention), Wq|Wk|Wv could be
    # stacked into a single (D, 3D) weight for one wider MXU pass.
    proj(xq_ref, wq_ref, bq_ref, q_ref)
    proj(xk_ref, wk_ref, bk_ref, k_ref)
    proj(xv_ref, wv_ref, bv_ref, v_ref)


def _attn_kernel(q_ref, k_ref, v_ref, wo_ref, bo_ref, o_ref, *, scale):
    """Head-batched attention + fused output projection.

    q_ref  : (1, h, TQ, d_k) bf16
    k_ref  : (1, h, S,  d_k) bf16
    v_ref  : (1, h, S,  d_k) bf16
    wo_ref : (h, d_k, D)     bf16 (per-head slabs of the output projection)
    bo_ref : (1, D)          f32
    o_ref  : (1, TQ, D)      f32 (lane-dense output block)
    """
    qh = q_ref[0] * scale            # (h, TQ, d_k) bf16 (scale folded into Q)
    kh = k_ref[0]                    # (h, S, d_k)
    vh = v_ref[0]                    # (h, S, d_k)

    # QK^T with heads as the batch dim; contraction over d_k, no explicit .T.
    s = jnp.einsum("hqd,hkd->hqk", qh, kh,
                   preferred_element_type=jnp.float32)          # (h, TQ, S) f32

    # Softmax (mask=None path), stats kept in f32.
    m = jnp.max(s, axis=-1, keepdims=True)
    e = jnp.exp(s - m)
    p = e * pl.reciprocal(jnp.sum(e, axis=-1, keepdims=True), approx=True)
    # TODO(synk): attention dropout (p=0.1) omitted -> matches eval() mode.

    ctx = jnp.einsum("hqk,hkd->hqd", p.astype(jnp.bfloat16), vh,
                     preferred_element_type=jnp.float32)        # (h, TQ, d_k)

    # Output projection fused in: per-head (d_k, D) Wo slabs, then reduce heads.
    per_head = jnp.einsum("hqf,hfd->hqd",
                          ctx.astype(jnp.bfloat16), wo_ref[...],
                          preferred_element_type=jnp.float32)   # (h, TQ, D)
    out = jnp.sum(per_head, axis=0) + bo_ref[0]                 # (TQ, D) f32
    o_ref[0] = out.astype(o_ref.dtype)


def multi_headed_attention(query, key, value, params, *, h,
                           row_tile=256, q_tile=256):
    """query/key/value: (B, S, D) float32. params: f32 weights in (in, out)
    layout (y = x @ W + b) and (1, out) biases."""
    B, S, D = query.shape
    assert D % h == 0
    d_k = D // h

    cdt = jnp.bfloat16  # MXU-native compute dtype; accumulation stays f32.
    xq = query.astype(cdt)
    xk = key.astype(cdt)
    xv = value.astype(cdt)
    wq = params["wq"].astype(cdt)
    wk = params["wk"].astype(cdt)
    wv = params["wv"].astype(cdt)
    bq, bk, bv = params["bq"], params["bk"], params["bv"]     # f32 (1, D)
    wo_h = params["wo"].astype(cdt).reshape(h, d_k, D)        # per-head slabs
    bo = params["bo"]                                         # f32 (1, D)

    TM = _pick_tile(S, row_tile)
    TQ = _pick_tile(S, q_tile)

    # ---- Kernel 1: fused QKV projections --------------------------------
    def act_spec():
        return pl.BlockSpec((1, TM, D), lambda b, i: (b, i, 0))

    w_spec = pl.BlockSpec((D, D), lambda b, i: (0, 0))
    b_spec = pl.BlockSpec((1, D), lambda b, i: (0, 0))
    # NOTE: weight index_maps are constant; on VMEM-tight parts (v7x 64 MiB)
    # pipeline_mode=pl.Buffered(1) on the weight specs would single-buffer them.

    q_p, k_p, v_p = pl.pallas_call(
        _qkv_proj_kernel,
        out_shape=tuple(jax.ShapeDtypeStruct((B, S, D), cdt) for _ in range(3)),
        grid_spec=pltpu.PrefetchScalarGridSpec(
            num_scalar_prefetch=0,
            grid=(B, S // TM),
            in_specs=[act_spec(), act_spec(), act_spec(),
                      w_spec, b_spec, w_spec, b_spec, w_spec, b_spec],
            out_specs=[act_spec(), act_spec(), act_spec()]),
        compiler_params=pltpu.CompilerParams(
            dimension_semantics=("parallel", "parallel")),
    )(xq, xk, xv, wq, bq, wk, bk, wv, bv)

    # ---- Head split: (B, S, D) -> (B, h, S, d_k). Pure XLA layout plumbing;
    # keeps lane-splitting reshapes/transposes out of the kernels.
    def to_heads(x):
        return x.reshape(B, S, h, d_k).transpose(0, 2, 1, 3)

    qh, kh, vh = to_heads(q_p), to_heads(k_p), to_heads(v_p)

    # ---- Kernel 2: head-batched attention + output projection -----------
    q_spec = pl.BlockSpec((1, h, TQ, d_k), lambda b, qi: (b, 0, qi, 0))
    kv_spec = pl.BlockSpec((1, h, S, d_k), lambda b, qi: (b, 0, 0, 0))
    wo_spec = pl.BlockSpec((h, d_k, D), lambda b, qi: (0, 0, 0))
    bo_spec = pl.BlockSpec((1, D), lambda b, qi: (0, 0))
    out_spec = pl.BlockSpec((1, TQ, D), lambda b, qi: (b, qi, 0))

    kernel = functools.partial(_attn_kernel, scale=1.0 / math.sqrt(d_k))

    # TODO(synk): for very long S, add a third "arbitrary" KV grid axis with
    # flash-style online-softmax (m/l/acc scratch) instead of resident K/V.
    return pl.pallas_call(
        kernel,
        out_shape=jax.ShapeDtypeStruct((B, S, D), jnp.float32),
        grid_spec=pltpu.PrefetchScalarGridSpec(
            num_scalar_prefetch=0,
            grid=(B, S // TQ),
            in_specs=[q_spec, kv_spec, kv_spec, wo_spec, bo_spec],
            out_specs=out_spec),
        compiler_params=pltpu.CompilerParams(
            dimension_semantics=("parallel", "parallel")),
    )(qh, kh, vh, wo_h, bo)


def _init_linear(key, d_in, d_out):
    """PyTorch-like init: U(-1/sqrt(d_in), 1/sqrt(d_in)).
    Returns weight in (in, out) layout plus bias (1, out)."""
    kw, kb = jax.random.split(key)
    bound = 1.0 / math.sqrt(d_in)
    w = jax.random.uniform(kw, (d_in, d_out), jnp.float32, -bound, bound)
    b = jax.random.uniform(kb, (1, d_out), jnp.float32, -bound, bound)
    return w, b


def _reference(query, key, value, params, *, h):
    """Pure-JAX f32 reference (PyTorch forward semantics, eval mode, no mask)."""
    B, S, D = query.shape
    d_k = D // h

    def lin(x, w, b):
        return x @ w + b[0]

    Q = lin(query, params["wq"], params["bq"]).reshape(B, S, h, d_k).transpose(0, 2, 1, 3)
    K = lin(key, params["wk"], params["bk"]).reshape(B, S, h, d_k).transpose(0, 2, 1, 3)
    V = lin(value, params["wv"], params["bv"]).reshape(B, S, h, d_k).transpose(0, 2, 1, 3)

    scores = jnp.einsum("bhqd,bhkd->bhqk", Q, K) / math.sqrt(d_k)
    p = jax.nn.softmax(scores, axis=-1)
    ctx = jnp.einsum("bhqk,bhkd->bhqd", p, V)
    ctx = ctx.transpose(0, 2, 1, 3).reshape(B, S, D)
    return lin(ctx, params["wo"], params["bo"])


if __name__ == "__main__":
    B, S, D, H = 2, 8, 32, 4

    root = jax.random.PRNGKey(0)
    kq, kk, kv, k1, k2, k3, k4 = jax.random.split(root, 7)

    query = jax.random.normal(kq, (B, S, D), jnp.float32)
    key_in = jax.random.normal(kk, (B, S, D), jnp.float32)
    value = jax.random.normal(kv, (B, S, D), jnp.float32)

    wq, bq = _init_linear(k1, D, D)
    wk, bk = _init_linear(k2, D, D)
    wv, bv = _init_linear(k3, D, D)
    wo, bo = _init_linear(k4, D, D)
    params = dict(wq=wq, bq=bq, wk=wk, bk=bk, wv=wv, bv=bv, wo=wo, bo=bo)

    out = multi_headed_attention(query, key_in, value, params, h=H)
    out = jax.block_until_ready(out)

    ref = _reference(query, key_in, value, params, h=H)
    assert out.shape == (B, S, D)
    # bf16 compute vs f32 reference -> loose-but-meaningful tolerance.
    assert jnp.allclose(out, ref, atol=5e-2, rtol=5e-2), "mismatch vs reference"

    print("KERNEL_OK")
</pallas_src>

<mosaic_0001>
module attributes {stable_mosaic.version = 11 : i64} {
  func.func @_qkv_proj_kernel(%arg0: i32, %arg1: i32, %arg2: memref<1x8x32xbf16, #tpu.memory_space<vmem>>, %arg3: memref<1x8x32xbf16, #tpu.memory_space<vmem>>, %arg4: memref<1x8x32xbf16, #tpu.memory_space<vmem>>, %arg5: memref<32x32xbf16, #tpu.memory_space<vmem>>, %arg6: memref<1x32xf32, #tpu.memory_space<vmem>>, %arg7: memref<32x32xbf16, #tpu.memory_space<vmem>>, %arg8: memref<1x32xf32, #tpu.memory_space<vmem>>, %arg9: memref<32x32xbf16, #tpu.memory_space<vmem>>, %arg10: memref<1x32xf32, #tpu.memory_space<vmem>>, %arg11: memref<1x8x32xbf16, #tpu.memory_space<vmem>>, %arg12: memref<1x8x32xbf16, #tpu.memory_space<vmem>>, %arg13: memref<1x8x32xbf16, #tpu.memory_space<vmem>>) attributes {dimension_semantics = [#tpu.dimension_semantics<parallel>, #tpu.dimension_semantics<parallel>], iteration_bounds = array<i64: 2, 1>, scalar_prefetch = 0 : i64, scratch_operands = 0 : i64, tpu.core_type = #tpu.core_type<tc>, window_params = [{transform_indices = @transform_0, window_bounds = array<i64: 1, 8, 32>}, {transform_indices = @transform_1, window_bounds = array<i64: 1, 8, 32>}, {transform_indices = @transform_2, window_bounds = array<i64: 1, 8, 32>}, {pipeline_mode = #tpu.pipeline_mode<synchronous>, transform_indices = @transform_3, window_bounds = array<i64: 32, 32>}, {pipeline_mode = #tpu.pipeline_mode<synchronous>, transform_indices = @transform_4, window_bounds = array<i64: 1, 32>}, {pipeline_mode = #tpu.pipeline_mode<synchronous>, transform_indices = @transform_5, window_bounds = array<i64: 32, 32>}, {pipeline_mode = #tpu.pipeline_mode<synchronous>, transform_indices = @transform_6, window_bounds = array<i64: 1, 32>}, {pipeline_mode = #tpu.pipeline_mode<synchronous>, transform_indices = @transform_7, window_bounds = array<i64: 32, 32>}, {pipeline_mode = #tpu.pipeline_mode<synchronous>, transform_indices = @transform_8, window_bounds = array<i64: 1, 32>}, {transform_indices = @transform_9, window_bounds = array<i64: 1, 8, 32>}, {transform_indices = @transform_10, window_bounds = array<i64: 1, 8, 32>}, {transform_indices = @transform_11, window_bounds = array<i64: 1, 8, 32>}]} {
    %c0 = arith.constant 0 : index
    %c0_0 = arith.constant 0 : index
    %c0_1 = arith.constant 0 : index
    %0 = vector.load %arg2[%c0, %c0_0, %c0_1] : memref<1x8x32xbf16, #tpu.memory_space<vmem>>, vector<1x8x32xbf16>
    %1 = vector.shape_cast %0 : vector<1x8x32xbf16> to vector<8x32xbf16>
    %c0_2 = arith.constant 0 : index
    %c0_3 = arith.constant 0 : index
    %2 = vector.load %arg5[%c0_2, %c0_3] : memref<32x32xbf16, #tpu.memory_space<vmem>>, vector<32x32xbf16>
    %cst = arith.constant dense<0.000000e+00> : vector<8x32xf32>
    %3 = tpu.matmul %1, %2, %cst {dimension_numbers = #tpu.dot_dimension_numbers<[1], [0], [0], [1], [0, 0, 1, 1], [], []>} : vector<8x32xbf16>, vector<32x32xbf16>, vector<8x32xf32> -> vector<8x32xf32>
    %c0_4 = arith.constant 0 : index
    %c0_5 = arith.constant 0 : index
    %4 = vector.load %arg6[%c0_4, %c0_5] : memref<1x32xf32, #tpu.memory_space<vmem>>, vector<1x32xf32>
    %5 = vector.shape_cast %4 : vector<1x32xf32> to vector<32xf32>
    %6 = vector.shape_cast %5 : vector<32xf32> to vector<1x32xf32>
    %7 = vector.broadcast %6 : vector<1x32xf32> to vector<8x32xf32>
    %8 = arith.addf %3, %7 : vector<8x32xf32>
    %9 = arith.truncf %8 : vector<8x32xf32> to vector<8x32xbf16>
    %c0_6 = arith.constant 0 : index
    %c0_7 = arith.constant 0 : index
    %c0_8 = arith.constant 0 : index
    %10 = vector.load %arg11[%c0_6, %c0_7, %c0_8] : memref<1x8x32xbf16, #tpu.memory_space<vmem>>, vector<1x8x32xbf16>
    %11 = vector.shape_cast %10 : vector<1x8x32xbf16> to vector<8x32xbf16>
    %12 = vector.shape_cast %9 : vector<8x32xbf16> to vector<1x8x32xbf16>
    tpu.vector_store %arg11[%c0_6, %c0_7, %c0_8], %12 {strides = array<i32>} : memref<1x8x32xbf16, #tpu.memory_space<vmem>>, vector<1x8x32xbf16>,
    %c0_9 = arith.constant 0 : index
    %c0_10 = arith.constant 0 : index
    %c0_11 = arith.constant 0 : index
    %13 = vector.load %arg3[%c0_9, %c0_10, %c0_11] : memref<1x8x32xbf16, #tpu.memory_space<vmem>>, vector<1x8x32xbf16>
    %14 = vector.shape_cast %13 : vector<1x8x32xbf16> to vector<8x32xbf16>
    %c0_12 = arith.constant 0 : index
    %c0_13 = arith.constant 0 : index
    %15 = vector.load %arg7[%c0_12, %c0_13] : memref<32x32xbf16, #tpu.memory_space<vmem>>, vector<32x32xbf16>
    %cst_14 = arith.constant dense<0.000000e+00> : vector<8x32xf32>
    %16 = tpu.matmul %14, %15, %cst_14 {dimension_numbers = #tpu.dot_dimension_numbers<[1], [0], [0], [1], [0, 0, 1, 1], [], []>} : vector<8x32xbf16>, vector<32x32xbf16>, vector<8x32xf32> -> vector<8x32xf32>
    %c0_15 = arith.constant 0 : index
    %c0_16 = arith.constant 0 : index
    %17 = vector.load %arg8[%c0_15, %c0_16] : memref<1x32xf32, #tpu.memory_space<vmem>>, vector<1x32xf32>
    %18 = vector.shape_cast %17 : vector<1x32xf32> to vector<32xf32>
    %19 = vector.shape_cast %18 : vector<32xf32> to vector<1x32xf32>
    %20 = vector.broadcast %19 : vector<1x32xf32> to vector<8x32xf32>
    %21 = arith.addf %16, %20 : vector<8x32xf32>
    %22 = arith.truncf %21 : vector<8x32xf32> to vector<8x32xbf16>
    %c0_17 = arith.constant 0 : index
    %c0_18 = arith.constant 0 : index
    %c0_19 = arith.constant 0 : index
    %23 = vector.load %arg12[%c0_17, %c0_18, %c0_19] : memref<1x8x32xbf16, #tpu.memory_space<vmem>>, vector<1x8x32xbf16>
    %24 = vector.shape_cast %23 : vector<1x8x32xbf16> to vector<8x32xbf16>
    %25 = vector.shape_cast %22 : vector<8x32xbf16> to vector<1x8x32xbf16>
    tpu.vector_store %arg12[%c0_17, %c0_18, %c0_19], %25 {strides = array<i32>} : memref<1x8x32xbf16, #tpu.memory_space<vmem>>, vector<1x8x32xbf16>,
    %c0_20 = arith.constant 0 : index
    %c0_21 = arith.constant 0 : index
    %c0_22 = arith.constant 0 : index
    %26 = vector.load %arg4[%c0_20, %c0_21, %c0_22] : memref<1x8x32xbf16, #tpu.memory_space<vmem>>, vector<1x8x32xbf16>
    %27 = vector.shape_cast %26 : vector<1x8x32xbf16> to vector<8x32xbf16>
    %c0_23 = arith.constant 0 : index
    %c0_24 = arith.constant 0 : index
    %28 = vector.load %arg9[%c0_23, %c0_24] : memref<32x32xbf16, #tpu.memory_space<vmem>>, vector<32x32xbf16>
    %cst_25 = arith.constant dense<0.000000e+00> : vector<8x32xf32>
    %29 = tpu.matmul %27, %28, %cst_25 {dimension_numbers = #tpu.dot_dimension_numbers<[1], [0], [0], [1], [0, 0, 1, 1], [], []>} : vector<8x32xbf16>, vector<32x32xbf16>, vector<8x32xf32> -> vector<8x32xf32>
    %c0_26 = arith.constant 0 : index
    %c0_27 = arith.constant 0 : index
    %30 = vector.load %arg10[%c0_26, %c0_27] : memref<1x32xf32, #tpu.memory_space<vmem>>, vector<1x32xf32>
    %31 = vector.shape_cast %30 : vector<1x32xf32> to vector<32xf32>
    %32 = vector.shape_cast %31 : vector<32xf32> to vector<1x32xf32>
    %33 = vector.broadcast %32 : vector<1x32xf32> to vector<8x32xf32>
    %34 = arith.addf %29, %33 : vector<8x32xf32>
    %35 = arith.truncf %34 : vector<8x32xf32> to vector<8x32xbf16>
    %c0_28 = arith.constant 0 : index
    %c0_29 = arith.constant 0 : index
    %c0_30 = arith.constant 0 : index
    %36 = vector.load %arg13[%c0_28, %c0_29, %c0_30] : memref<1x8x32xbf16, #tpu.memory_space<vmem>>, vector<1x8x32xbf16>
    %37 = vector.shape_cast %36 : vector<1x8x32xbf16> to vector<8x32xbf16>
    %38 = vector.shape_cast %35 : vector<8x32xbf16> to vector<1x8x32xbf16>
    tpu.vector_store %arg13[%c0_28, %c0_29, %c0_30], %38 {strides = array<i32>} : memref<1x8x32xbf16, #tpu.memory_space<vmem>>, vector<1x8x32xbf16>,
    return
  }
  func.func @transform_0(%arg0: i32, %arg1: i32) -> (i32, i32, i32) {
    %c0_i32 = arith.constant 0 : i32
    %c0_i32_0 = arith.constant 0 : i32
    return %arg0, %arg1, %c0_i32 : i32, i32, i32
  }
  func.func @transform_1(%arg0: i32, %arg1: i32) -> (i32, i32, i32) {
    %c0_i32 = arith.constant 0 : i32
    %c0_i32_0 = arith.constant 0 : i32
    return %arg0, %arg1, %c0_i32 : i32, i32, i32
  }
  func.func @transform_2(%arg0: i32, %arg1: i32) -> (i32, i32, i32) {
    %c0_i32 = arith.constant 0 : i32
    %c0_i32_0 = arith.constant 0 : i32
    return %arg0, %arg1, %c0_i32 : i32, i32, i32
  }
  func.func @transform_3(%arg0: i32, %arg1: i32) -> (i32, i32) {
    %c0_i32 = arith.constant 0 : i32
    %c0_i32_0 = arith.constant 0 : i32
    %c0_i32_1 = arith.constant 0 : i32
    return %c0_i32, %c0_i32_0 : i32, i32
  }
  func.func @transform_4(%arg0: i32, %arg1: i32) -> (i32, i32) {
    %c0_i32 = arith.constant 0 : i32
    %c0_i32_0 = arith.constant 0 : i32
    %c0_i32_1 = arith.constant 0 : i32
    return %c0_i32, %c0_i32_0 : i32, i32
  }
  func.func @transform_5(%arg0: i32, %arg1: i32) -> (i32, i32) {
    %c0_i32 = arith.constant 0 : i32
    %c0_i32_0 = arith.constant 0 : i32
    %c0_i32_1 = arith.constant 0 : i32
    return %c0_i32, %c0_i32_0 : i32, i32
  }
  func.func @transform_6(%arg0: i32, %arg1: i32) -> (i32, i32) {
    %c0_i32 = arith.constant 0 : i32
    %c0_i32_0 = arith.constant 0 : i32
    %c0_i32_1 = arith.constant 0 : i32
    return %c0_i32, %c0_i32_0 : i32, i32
  }
  func.func @transform_7(%arg0: i32, %arg1: i32) -> (i32, i32) {
    %c0_i32 = arith.constant 0 : i32
    %c0_i32_0 = arith.constant 0 : i32
    %c0_i32_1 = arith.constant 0 : i32
    return %c0_i32, %c0_i32_0 : i32, i32
  }
  func.func @transform_8(%arg0: i32, %arg1: i32) -> (i32, i32) {
    %c0_i32 = arith.constant 0 : i32
    %c0_i32_0 = arith.constant 0 : i32
    %c0_i32_1 = arith.constant 0 : i32
    return %c0_i32, %c0_i32_0 : i32, i32
  }
  func.func @transform_9(%arg0: i32, %arg1: i32) -> (i32, i32, i32) {
    %c0_i32 = arith.constant 0 : i32
    %c0_i32_0 = arith.constant 0 : i32
    return %arg0, %arg1, %c0_i32 : i32, i32, i32
  }
  func.func @transform_10(%arg0: i32, %arg1: i32) -> (i32, i32, i32) {
    %c0_i32 = arith.constant 0 : i32
    %c0_i32_0 = arith.constant 0 : i32
    return %arg0, %arg1, %c0_i32 : i32, i32, i32
  }
  func.func @transform_11(%arg0: i32, %arg1: i32) -> (i32, i32, i32) {
    %c0_i32 = arith.constant 0 : i32
    %c0_i32_0 = arith.constant 0 : i32
    return %arg0, %arg1, %c0_i32 : i32, i32, i32
  }
}

</mosaic_0001>

<llo_original>
// kernel: tpu_custom_call.1
$region0: #{tpu_custom_call.1}
  #allocation0 [shape = 'u32[]', space=smem, size = 0x4, offset = 0x4, fixed_abs, tag = 'smem constant byte address 0x4 - core index']
  #allocation1 [shape = 'u32[72,128]{1,0:T(1,128)}', space=vmem, size = 0x9000, scoped, tag = 'internal scratch']
  %s0 = inlined_call_operand.hbm [shape: bf16[2,8,32], index: 0, kind: input, shape index: {}]
  %s1 = inlined_call_operand.hbm [shape: bf16[2,8,32], index: 1, kind: input, shape index: {}]
  %s2 = inlined_call_operand.hbm [shape: bf16[2,8,32], index: 2, kind: input, shape index: {}]
  %s3 = inlined_call_operand.hbm [shape: bf16[32,32], index: 3, kind: input, shape index: {}]
  %s4 = inlined_call_operand.vmem [shape: f32[1,32], index: 4, kind: input, shape index: {}]
  %s5 = inlined_call_operand.hbm [shape: bf16[32,32], index: 5, kind: input, shape index: {}]
  %s6 = inlined_call_operand.vmem [shape: f32[1,32], index: 6, kind: input, shape index: {}]
  %s7 = inlined_call_operand.hbm [shape: bf16[32,32], index: 7, kind: input, shape index: {}]
  %s8 = inlined_call_operand.vmem [shape: f32[1,32], index: 8, kind: input, shape index: {}]
  %s9 = inlined_call_operand.hbm [shape: bf16[2,8,32], index: 9, kind: output, shape index: {0}]
  %s10 = inlined_call_operand.hbm [shape: bf16[2,8,32], index: 10, kind: output, shape index: {1}]
  %s11 = inlined_call_operand.hbm [shape: bf16[2,8,32], index: 11, kind: output, shape index: {2}]
  %12 = xla_tuple %s9, %s10, %s11
  %s13 = sld [smem:[#allocation0]]
  $region109: #{tpu_custom_call.1} parent=0
    _
  %s15 = ssub.s32 1, %s13
  %s16 = scalar_select 0, %s15, %s13
  $region1: #{tpu_custom_call.1} parent=0
    #allocation2 [shape = 'u8[4096]{0}', space=vmem, size = 0x1000, scoped, tag = 'input window, operand 0']
    #allocation3 [shape = 's32[2]{0}', space=sflag, size = 0x8, scoped, tag = 'scoped memory for tpu_custom_call.1']
    #allocation4 [shape = 's32[2]{0}', space=sflag, size = 0x8, scoped, tag = 'scoped memory for tpu_custom_call.1']
    #allocation5 [shape = 'u8[4096]{0}', space=vmem, size = 0x1000, scoped, tag = 'input window, operand 1']
    #allocation6 [shape = 's32[2]{0}', space=sflag, size = 0x8, scoped, tag = 'scoped memory for tpu_custom_call.1']
    #allocation7 [shape = 'u8[4096]{0}', space=vmem, size = 0x1000, scoped, tag = 'input window, operand 2']
    #allocation8 [shape = 'u8[8192]{0}', space=vmem, size = 0x2000, scoped, tag = 'input window, operand 3, single buffered']
    #allocation9 [shape = 's32[1]{0}', space=sflag, size = 0x4, scoped, tag = 'scoped memory for tpu_custom_call.1']
    #allocation10 [shape = 'u8[8192]{0}', space=vmem, size = 0x2000, scoped, tag = 'input window, operand 5, single buffered']
    #allocation11 [shape = 'u8[8192]{0}', space=vmem, size = 0x2000, scoped, tag = 'input window, operand 7, single buffered']
    #allocation12 [shape = 's32[1]{0}', space=sflag, size = 0x4, scoped, tag = 'scoped memory for tpu_custom_call.1']
    #allocation13 [shape = 'u8[4096]{0}', space=vmem, size = 0x1000, scoped, tag = 'output window, operand 0']
    #allocation14 [shape = 'u8[4096]{0}', space=vmem, size = 0x1000, scoped, tag = 'output window, operand 1']
    #allocation15 [shape = 's32[2]{0}', space=sflag, size = 0x8, scoped, tag = 'scoped memory for tpu_custom_call.1']
    #allocation16 [shape = 'u8[4096]{0}', space=vmem, size = 0x1000, scoped, tag = 'output window, operand 2']
    %17 = vsyncpa [#allocation3], 0
    %s18 = scalar_lea.sflag [#allocation3], 1
    %19 = vsyncpa %s18, 0
    %20 = vsyncpa [#allocation6], 0
    %s21 = scalar_lea.sflag [#allocation6], 1
    %22 = vsyncpa %s21, 0
    %23 = vsyncpa [#allocation9], 0
    %24 = vsyncpa [#allocation12], 0
    %25 = vsyncpa [#allocation4], 0
    %s26 = scalar_lea.sflag [#allocation4], 1
    %27 = vsyncpa %s26, 0
    %28 = vsyncpa [#allocation15], 0
    %s29 = scalar_lea.sflag [#allocation15], 1
    %30 = vsyncpa %s29, 0
    loop: start=0, step=1, limit=4
    $region2: #{tpu_custom_call.1} parent=1 // loop_pre_header
      _
    $region3: #{tpu_custom_call.1} parent=1 // loop_header
      %s32 = sphi 0, %s36
      %p33 = scmp.ge.s32.totalorder %s32, 4
      %s39 = sphi 0, %s51
      %s40 = sphi 0, %s47
      %s41 = sphi 0, %s39
      %s42 = sphi 0, %s40
      %s43 = sphi 0, %s41
      %s44 = sphi 0, %s42
      %s56 = sphi 0, %s58
      %s59 = sphi 0, %s56
      %s60 = sphi 0, %s59
      %s76 = sphi 0, %s60
      %s84 = sphi 0, %s86
      %s87 = sphi 0, %s84
      %s88 = sphi 0, %s87
      %s104 = sphi 0, %s88
      %s112 = sphi 0, %s114
      %s115 = sphi 0, %s112
      %s116 = sphi 0, %s115
      %s132 = sphi 0, %s116
      %s136 = sphi 0, %s136
      %s138 = sphi 0, %s136
      %s139 = sphi 0, %s138
      %s153 = sphi 0, %s139
      %s157 = sphi 0, %s157
      %s159 = sphi 0, %s157
      %s160 = sphi 0, %s159
      %s174 = sphi 0, %s160
      %s178 = sphi 0, %s178
      %s180 = sphi 0, %s178
      %s181 = sphi 0, %s180
      %s195 = sphi 0, %s181
      %s199 = sphi 0, %s199
      %s201 = sphi 0, %s199
      %s202 = sphi 0, %s201
      %s216 = sphi 0, %s202
      %s220 = sphi 0, %s220
      %s222 = sphi 0, %s220
      %s223 = sphi 0, %s222
      %s237 = sphi 0, %s223
      %s241 = sphi 0, %s241
      %s243 = sphi 0, %s241
      %s244 = sphi 0, %s243
      %s258 = sphi 0, %s244
      %s266 = sphi 0, %s268
      %s269 = sphi 0, %s266
      %s270 = sphi 0, %s269
      %s286 = sphi 0, %s270
      %s294 = sphi 0, %s296
      %s297 = sphi 0, %s294
      %s298 = sphi 0, %s297
      %s314 = sphi 0, %s298
      %s322 = sphi 0, %s324
      %s325 = sphi 0, %s322
      %s326 = sphi 0, %s325
      %s342 = sphi 0, %s326
    $region4: #{tpu_custom_call.1} parent=1 // loop_header_branch
      %35 = sbr.rel (%p33) target = $region8
    $region5: #{tpu_custom_call.1} parent=1 // loop_body
      %s37 = ssub.s32 %s32, 1
      %s38 = ssub.s32 %s32, 2
      %s45 = sadd.s32 1, %s40
      %p46 = scmp.ge.s32.totalorder %s45, 1
      %s47 = scalar_select %p46, 0, %s45
      %s48 = sadd.s32 1, %s39
      %s49 = scalar_select %p46, %s48, %s39
      %p50 = scmp.ge.s32.totalorder %s49, 2
      %s51 = scalar_select %p50, 0, %s49
      %s52 = ssub.s32 %s39, %s51
      %s53 = ssub.s32 %s40, %s47
      %s54 = sor.u32 %s52, %s53
      %p55 = scmp.eq.s32.totalorder %s54, 0
      %s57 = sadd.s32 %s56, 1
      %s58 = scalar_select %p55, %s56, %s57
      %p61 = pneg %p55
      %p62 = scmp.eq.s32.totalorder %s32, 1
      %p63 = por %p61, %p62
      %p64 = scmp.ne.s32.totalorder %s56, %s59
      %p65 = scmp.eq.s32.totalorder %s32, 0
      %p66 = por %p64, %p65
      %p67 = scmp.ne.s32.totalorder %s56, %s59
      %p68 = scmp.eq.s32.totalorder %s37, 1
      %p69 = por %p67, %p68
      %p70 = scmp.ne.s32.totalorder %s59, %s60
      %p71 = scmp.eq.s32.totalorder %s37, 0
      %p72 = por %p70, %p71
      %p73 = scmp.ne.s32.totalorder %s59, %s60
      %p74 = scmp.eq.s32.totalorder %s38, 1
      %p75 = por %p73, %p74
      %p77 = scmp.ne.s32.totalorder %s60, %s76
      %p78 = scmp.eq.s32.totalorder %s38, 0
      %p79 = por %p77, %p78
      %s80 = ssub.s32 %s39, %s51
      %s81 = ssub.s32 %s40, %s47
      %s82 = sor.u32 %s80, %s81
      %p83 = scmp.eq.s32.totalorder %s82, 0
      %s85 = sadd.s32 %s84, 1
      %s86 = scalar_select %p83, %s84, %s85
      %p89 = pneg %p83
      %p90 = scmp.eq.s32.totalorder %s32, 1
      %p91 = por %p89, %p90
      %p92 = scmp.ne.s32.totalorder %s84, %s87
      %p93 = scmp.eq.s32.totalorder %s32, 0
      %p94 = por %p92, %p93
      %p95 = scmp.ne.s32.totalorder %s84, %s87
      %p96 = scmp.eq.s32.totalorder %s37, 1
      %p97 = por %p95, %p96
      %p98 = scmp.ne.s32.totalorder %s87, %s88
      %p99 = scmp.eq.s32.totalorder %s37, 0
      %p100 = por %p98, %p99
      %p101 = scmp.ne.s32.totalorder %s87, %s88
      %p102 = scmp.eq.s32.totalorder %s38, 1
      %p103 = por %p101, %p102
      %p105 = scmp.ne.s32.totalorder %s88, %s104
      %p106 = scmp.eq.s32.totalorder %s38, 0
      %p107 = por %p105, %p106
      %s108 = ssub.s32 %s39, %s51
      %s109 = ssub.s32 %s40, %s47
      %s110 = sor.u32 %s108, %s109
      %p111 = scmp.eq.s32.totalorder %s110, 0
      %s113 = sadd.s32 %s112, 1
      %s114 = scalar_select %p111, %s112, %s113
      %p117 = pneg %p111
      %p118 = scmp.eq.s32.totalorder %s32, 1
      %p119 = por %p117, %p118
      %p120 = scmp.ne.s32.totalorder %s112, %s115
      %p121 = scmp.eq.s32.totalorder %s32, 0
      %p122 = por %p120, %p121
      %p123 = scmp.ne.s32.totalorder %s112, %s115
      %p124 = scmp.eq.s32.totalorder %s37, 1
      %p125 = por %p123, %p124
      %p126 = scmp.ne.s32.totalorder %s115, %s116
      %p127 = scmp.eq.s32.totalorder %s37, 0
      %p128 = por %p126, %p127
      %p129 = scmp.ne.s32.totalorder %s115, %s116
      %p130 = scmp.eq.s32.totalorder %s38, 1
      %p131 = por %p129, %p130
      %p133 = scmp.ne.s32.totalorder %s116, %s132
      %p134 = scmp.eq.s32.totalorder %s38, 0
      %p135 = por %p133, %p134
      %s137 = sadd.s32 %s136, 1
      %p140 = scmp.eq.s32.totalorder %s32, 1
      %p141 = scmp.ne.s32.totalorder %s136, %s138
      %p142 = scmp.eq.s32.totalorder %s32, 0
      %p143 = por %p141, %p142
      %p144 = scmp.ne.s32.totalorder %s136, %s138
      %p145 = scmp.eq.s32.totalorder %s37, 1
      %p146 = por %p144, %p145
      %p147 = scmp.ne.s32.totalorder %s138, %s139
      %p148 = scmp.eq.s32.totalorder %s37, 0
      %p149 = por %p147, %p148
      %p150 = scmp.ne.s32.totalorder %s138, %s139
      %p151 = scmp.eq.s32.totalorder %s38, 1
      %p152 = por %p150, %p151
      %p154 = scmp.ne.s32.totalorder %s139, %s153
      %p155 = scmp.eq.s32.totalorder %s38, 0
      %p156 = por %p154, %p155
      %s158 = sadd.s32 %s157, 1
      %p161 = scmp.eq.s32.totalorder %s32, 1
      %p162 = scmp.ne.s32.totalorder %s157, %s159
      %p163 = scmp.eq.s32.totalorder %s32, 0
      %p164 = por %p162, %p163
      %p165 = scmp.ne.s32.totalorder %s157, %s159
      %p166 = scmp.eq.s32.totalorder %s37, 1
      %p167 = por %p165, %p166
      %p168 = scmp.ne.s32.totalorder %s159, %s160
      %p169 = scmp.eq.s32.totalorder %s37, 0
      %p170 = por %p168, %p169
      %p171 = scmp.ne.s32.totalorder %s159, %s160
      %p172 = scmp.eq.s32.totalorder %s38, 1
      %p173 = por %p171, %p172
      %p175 = scmp.ne.s32.totalorder %s160, %s174
      %p176 = scmp.eq.s32.totalorder %s38, 0
      %p177 = por %p175, %p176
      %s179 = sadd.s32 %s178, 1
      %p182 = scmp.eq.s32.totalorder %s32, 1
      %p183 = scmp.ne.s32.totalorder %s178, %s180
      %p184 = scmp.eq.s32.totalorder %s32, 0
      %p185 = por %p183, %p184
      %p186 = scmp.ne.s32.totalorder %s178, %s180
      %p187 = scmp.eq.s32.totalorder %s37, 1
      %p188 = por %p186, %p187
      %p189 = scmp.ne.s32.totalorder %s180, %s181
      %p190 = scmp.eq.s32.totalorder %s37, 0
      %p191 = por %p189, %p190
      %p192 = scmp.ne.s32.totalorder %s180, %s181
      %p193 = scmp.eq.s32.totalorder %s38, 1
      %p194 = por %p192, %p193
      %p196 = scmp.ne.s32.totalorder %s181, %s195
      %p197 = scmp.eq.s32.totalorder %s38, 0
      %p198 = por %p196, %p197
      %s200 = sadd.s32 %s199, 1
      %p203 = scmp.eq.s32.totalorder %s32, 1
      %p204 = scmp.ne.s32.totalorder %s199, %s201
      %p205 = scmp.eq.s32.totalorder %s32, 0
      %p206 = por %p204, %p205
      %p207 = scmp.ne.s32.totalorder %s199, %s201
      %p208 = scmp.eq.s32.totalorder %s37, 1
      %p209 = por %p207, %p208
      %p210 = scmp.ne.s32.totalorder %s201, %s202
      %p211 = scmp.eq.s32.totalorder %s37, 0
      %p212 = por %p210, %p211
      %p213 = scmp.ne.s32.totalorder %s201, %s202
      %p214 = scmp.eq.s32.totalorder %s38, 1
      %p215 = por %p213, %p214
      %p217 = scmp.ne.s32.totalorder %s202, %s216
      %p218 = scmp.eq.s32.totalorder %s38, 0
      %p219 = por %p217, %p218
      %s221 = sadd.s32 %s220, 1
      %p224 = scmp.eq.s32.totalorder %s32, 1
      %p225 = scmp.ne.s32.totalorder %s220, %s222
      %p226 = scmp.eq.s32.totalorder %s32, 0
      %p227 = por %p225, %p226
      %p228 = scmp.ne.s32.totalorder %s220, %s222
      %p229 = scmp.eq.s32.totalorder %s37, 1
      %p230 = por %p228, %p229
      %p231 = scmp.ne.s32.totalorder %s222, %s223
      %p232 = scmp.eq.s32.totalorder %s37, 0
      %p233 = por %p231, %p232
      %p234 = scmp.ne.s32.totalorder %s222, %s223
      %p235 = scmp.eq.s32.totalorder %s38, 1
      %p236 = por %p234, %p235
      %p238 = scmp.ne.s32.totalorder %s223, %s237
      %p239 = scmp.eq.s32.totalorder %s38, 0
      %p240 = por %p238, %p239
      %s242 = sadd.s32 %s241, 1
      %p245 = scmp.eq.s32.totalorder %s32, 1
      %p246 = scmp.ne.s32.totalorder %s241, %s243
      %p247 = scmp.eq.s32.totalorder %s32, 0
      %p248 = por %p246, %p247
      %p249 = scmp.ne.s32.totalorder %s241, %s243
      %p250 = scmp.eq.s32.totalorder %s37, 1
      %p251 = por %p249, %p250
      %p252 = scmp.ne.s32.totalorder %s243, %s244
      %p253 = scmp.eq.s32.totalorder %s37, 0
      %p254 = por %p252, %p253
      %p255 = scmp.ne.s32.totalorder %s243, %s244
      %p256 = scmp.eq.s32.totalorder %s38, 1
      %p257 = por %p255, %p256
      %p259 = scmp.ne.s32.totalorder %s244, %s258
      %p260 = scmp.eq.s32.totalorder %s38, 0
      %p261 = por %p259, %p260
      %s262 = ssub.s32 %s39, %s51
      %s263 = ssub.s32 %s40, %s47
      %s264 = sor.u32 %s262, %s263
      %p265 = scmp.eq.s32.totalorder %s264, 0
      %s267 = sadd.s32 %s266, 1
      %s268 = scalar_select %p265, %s266, %s267
      %p271 = pneg %p265
      %p272 = scmp.eq.s32.totalorder %s32, 1
      %p273 = por %p271, %p272
      %p274 = scmp.ne.s32.totalorder %s266, %s269
      %p275 = scmp.eq.s32.totalorder %s32, 0
      %p276 = por %p274, %p275
      %p277 = scmp.ne.s32.totalorder %s266, %s269
      %p278 = scmp.eq.s32.totalorder %s37, 1
      %p279 = por %p277, %p278
      %p280 = scmp.ne.s32.totalorder %s269, %s270
      %p281 = scmp.eq.s32.totalorder %s37, 0
      %p282 = por %p280, %p281
      %p283 = scmp.ne.s32.totalorder %s269, %s270
      %p284 = scmp.eq.s32.totalorder %s38, 1
      %p285 = por %p283, %p284
      %p287 = scmp.ne.s32.totalorder %s270, %s286
      %p288 = scmp.eq.s32.totalorder %s38, 0
      %p289 = por %p287, %p288
      %s290 = ssub.s32 %s39, %s51
      %s291 = ssub.s32 %s40, %s47
      %s292 = sor.u32 %s290, %s291
      %p293 = scmp.eq.s32.totalorder %s292, 0
      %s295 = sadd.s32 %s294, 1
      %s296 = scalar_select %p293, %s294, %s295
      %p299 = pneg %p293
      %p300 = scmp.eq.s32.totalorder %s32, 1
      %p301 = por %p299, %p300
      %p302 = scmp.ne.s32.totalorder %s294, %s297
      %p303 = scmp.eq.s32.totalorder %s32, 0
      %p304 = por %p302, %p303
      %p305 = scmp.ne.s32.totalorder %s294, %s297
      %p306 = scmp.eq.s32.totalorder %s37, 1
      %p307 = por %p305, %p306
      %p308 = scmp.ne.s32.totalorder %s297, %s298
      %p309 = scmp.eq.s32.totalorder %s37, 0
      %p310 = por %p308, %p309
      %p311 = scmp.ne.s32.totalorder %s297, %s298
      %p312 = scmp.eq.s32.totalorder %s38, 1
      %p313 = por %p311, %p312
      %p315 = scmp.ne.s32.totalorder %s298, %s314
      %p316 = scmp.eq.s32.totalorder %s38, 0
      %p317 = por %p315, %p316
      %s318 = ssub.s32 %s39, %s51
      %s319 = ssub.s32 %s40, %s47
      %s320 = sor.u32 %s318, %s319
      %p321 = scmp.eq.s32.totalorder %s320, 0
      %s323 = sadd.s32 %s322, 1
      %s324 = scalar_select %p321, %s322, %s323
      %p327 = pneg %p321
      %p328 = scmp.eq.s32.totalorder %s32, 1
      %p329 = por %p327, %p328
      %p330 = scmp.ne.s32.totalorder %s322, %s325
      %p331 = scmp.eq.s32.totalorder %s32, 0
      %p332 = por %p330, %p331
      %p333 = scmp.ne.s32.totalorder %s322, %s325
      %p334 = scmp.eq.s32.totalorder %s37, 1
      %p335 = por %p333, %p334
      %p336 = scmp.ne.s32.totalorder %s325, %s326
      %p337 = scmp.eq.s32.totalorder %s37, 0
      %p338 = por %p336, %p337
      %p339 = scmp.ne.s32.totalorder %s325, %s326
      %p340 = scmp.eq.s32.totalorder %s38, 1
      %p341 = por %p339, %p340
      %p343 = scmp.ne.s32.totalorder %s326, %s342
      %p344 = scmp.eq.s32.totalorder %s38, 0
      %p345 = por %p343, %p344
      %p346 = scmp.le.s32.totalorder 1, %s32
      %p347 = scmp.lt.s32.totalorder %s32, 3
      %p348 = pnand %p346, %p347
      %p349 = pneg %p348
      // Predicated region
      $region9: #{tpu_custom_call.1} parent=5 // pred_check
        _
      $region10: #{tpu_custom_call.1} parent=5 // pred_check_branch
        %351 = sbr.rel (%p348) target = $region12
      $region11: #{tpu_custom_call.1} parent=5 // pred_region
        %s352 = ssub.s32 %s32, 1
        // Predicated region
        $region13: #{tpu_custom_call.1} parent=11 // pred_check
          %p353 = pneg %p149
        $region14: #{tpu_custom_call.1} parent=11 // pred_check_branch
          %355 = sbr.rel (%p353) target = $region16
        $region15: #{tpu_custom_call.1} parent=11 // pred_region
          %357 = vsyncadd [#allocation9], 0
          %s358 = sshll.u32 %s3, 4
          %s359 = int_to_ptr.hbm [resolvable:$true] %s358
          %s360 = sshll.u32 [#allocation8], 4
          %s361 = int_to_ptr.vmem [resolvable:$true] %s360
          %366 = dma.hbm_to_vmem [thread:$0]  %s359, 256, %s361, [#allocation9], 64, 64, 4
        $region16: #{tpu_custom_call.1} parent=11 // pred_fallthru
          _
        // Predicated region
        $region17: #{tpu_custom_call.1} parent=11 // pred_check
          %p367 = pneg %p170
        $region18: #{tpu_custom_call.1} parent=11 // pred_check_branch
          %369 = sbr.rel (%p367) target = $region20
        $region19: #{tpu_custom_call.1} parent=11 // pred_region
          _
        $region20: #{tpu_custom_call.1} parent=11 // pred_fallthru
          _
        // Predicated region
        $region21: #{tpu_custom_call.1} parent=11 // pred_check
          %p370 = pneg %p191
        $region22: #{tpu_custom_call.1} parent=11 // pred_check_branch
          %372 = sbr.rel (%p370) target = $region24
        $region23: #{tpu_custom_call.1} parent=11 // pred_region
          %374 = vsyncadd [#allocation9], 0
          %s375 = sshll.u32 %s5, 4
          %s376 = int_to_ptr.hbm [resolvable:$true] %s375
          %s377 = sshll.u32 [#allocation10], 4
          %s378 = int_to_ptr.vmem [resolvable:$true] %s377
          %383 = dma.hbm_to_vmem [thread:$0]  %s376, 256, %s378, [#allocation9], 64, 64, 4
        $region24: #{tpu_custom_call.1} parent=11 // pred_fallthru
          _
        // Predicated region
        $region25: #{tpu_custom_call.1} parent=11 // pred_check
          %p384 = pneg %p212
        $region26: #{tpu_custom_call.1} parent=11 // pred_check_branch
          %386 = sbr.rel (%p384) target = $region28
        $region27: #{tpu_custom_call.1} parent=11 // pred_region
          _
        $region28: #{tpu_custom_call.1} parent=11 // pred_fallthru
          _
        // Predicated region
        $region29: #{tpu_custom_call.1} parent=11 // pred_check
          %p387 = pneg %p233
        $region30: #{tpu_custom_call.1} parent=11 // pred_check_branch
          %389 = sbr.rel (%p387) target = $region32
        $region31: #{tpu_custom_call.1} parent=11 // pred_region
          %391 = vsyncadd [#allocation12], 0
          %s392 = sshll.u32 %s7, 4
          %s393 = int_to_ptr.hbm [resolvable:$true] %s392
          %s394 = sshll.u32 [#allocation11], 4
          %s395 = int_to_ptr.vmem [resolvable:$true] %s394
          %400 = dma.hbm_to_vmem [thread:$0]  %s393, 256, %s395, [#allocation12], 64, 64, 4
        $region32: #{tpu_custom_call.1} parent=11 // pred_fallthru
          _
        // Predicated region
        $region33: #{tpu_custom_call.1} parent=11 // pred_check
          %p401 = pneg %p254
        $region34: #{tpu_custom_call.1} parent=11 // pred_check_branch
          %403 = sbr.rel (%p401) target = $region36
        $region35: #{tpu_custom_call.1} parent=11 // pred_region
          _
        $region36: #{tpu_custom_call.1} parent=11 // pred_fallthru
          _
      $region12: #{tpu_custom_call.1} parent=5 // pred_fallthru
        _
      %p404 = scmp.lt.s32.totalorder %s32, 2
      // Predicated region
      $region37: #{tpu_custom_call.1} parent=5 // pred_check
        %p405 = pneg %p404
      $region38: #{tpu_custom_call.1} parent=5 // pred_check_branch
        %407 = sbr.rel (%p405) target = $region40
      $region39: #{tpu_custom_call.1} parent=5 // pred_region
        // Predicated region
        $region41: #{tpu_custom_call.1} parent=39 // pred_check
          %p408 = pneg %p66
        $region42: #{tpu_custom_call.1} parent=39 // pred_check_branch
          %410 = sbr.rel (%p408) target = $region44
        $region43: #{tpu_custom_call.1} parent=39 // pred_region
          %s411 = sand.u32 %s56, 1
          %s412 = scalar_lea.sflag [#allocation3], %s411
          %s413 = sand.u32 %s56, 1
          %s414 = smul.addr %s413, 4
          %s415 = scalar_lea.vmem [#allocation2], %s414
          %417 = vsyncadd %s412, 0
          %s418 = sadd.s32 %s40, %s39
          %s419 = smul.addr %s418, 4
          %s420 = scalar_lea.hbm %s0, %s419
          %s422 = sshll.u32 %s420, 4
          %s423 = int_to_ptr.hbm [resolvable:$true] %s422
          %s424 = sshll.u32 %s415, 4
          %s425 = int_to_ptr.vmem [resolvable:$true] %s424
          %427 = dma.hbm_to_vmem [thread:$0]  %s423, 64, %s425, %s412
        $region44: #{tpu_custom_call.1} parent=39 // pred_fallthru
          _
        // Predicated region
        $region45: #{tpu_custom_call.1} parent=39 // pred_check
          %p428 = pneg %p94
        $region46: #{tpu_custom_call.1} parent=39 // pred_check_branch
          %430 = sbr.rel (%p428) target = $region48
        $region47: #{tpu_custom_call.1} parent=39 // pred_region
          %s431 = sand.u32 %s32, 1
          %s432 = scalar_lea.sflag [#allocation6], %s431
          %s433 = sand.u32 %s84, 1
          %s434 = smul.addr %s433, 4
          %s435 = scalar_lea.vmem [#allocation5], %s434
          %437 = vsyncadd %s432, 0
          %s438 = sadd.s32 %s40, %s39
          %s439 = smul.addr %s438, 4
          %s440 = scalar_lea.hbm %s1, %s439
          %s442 = sshll.u32 %s440, 4
          %s443 = int_to_ptr.hbm [resolvable:$true] %s442
          %s444 = sshll.u32 %s435, 4
          %s445 = int_to_ptr.vmem [resolvable:$true] %s444
          %447 = dma.hbm_to_vmem [thread:$0]  %s443, 64, %s445, %s432
        $region48: #{tpu_custom_call.1} parent=39 // pred_fallthru
          _
        // Predicated region
        $region49: #{tpu_custom_call.1} parent=39 // pred_check
          %p448 = pneg %p122
        $region50: #{tpu_custom_call.1} parent=39 // pred_check_branch
          %450 = sbr.rel (%p448) target = $region52
        $region51: #{tpu_custom_call.1} parent=39 // pred_region
          %s451 = sand.u32 %s32, 1
          %s452 = scalar_lea.sflag [#allocation6], %s451
          %s453 = sand.u32 %s112, 1
          %s454 = smul.addr %s453, 4
          %s455 = scalar_lea.vmem [#allocation7], %s454
          %457 = vsyncadd %s452, 0
          %s458 = sadd.s32 %s40, %s39
          %s459 = smul.addr %s458, 4
          %s460 = scalar_lea.hbm %s2, %s459
          %s462 = sshll.u32 %s460, 4
          %s463 = int_to_ptr.hbm [resolvable:$true] %s462
          %s464 = sshll.u32 %s455, 4
          %s465 = int_to_ptr.vmem [resolvable:$true] %s464
          %467 = dma.hbm_to_vmem [thread:$0]  %s463, 64, %s465, %s452
        $region52: #{tpu_custom_call.1} parent=39 // pred_fallthru
          _
      $region40: #{tpu_custom_call.1} parent=5 // pred_fallthru
        _
      %p468 = scmp.le.s32.totalorder 1, %s32
      %p469 = scmp.lt.s32.totalorder %s32, 3
      %p470 = pnand %p468, %p469
      %p471 = pneg %p470
      // Predicated region
      $region53: #{tpu_custom_call.1} parent=5 // pred_check
        _
      $region54: #{tpu_custom_call.1} parent=5 // pred_check_branch
        %473 = sbr.rel (%p470) target = $region56
      $region55: #{tpu_custom_call.1} parent=5 // pred_region
        %s474 = ssub.s32 %s32, 1
        %s475 = sand.u32 %s59, 1
        %s476 = scalar_lea.sflag [#allocation3], %s475
        %s477 = sand.u32 %s59, 1
        %s478 = smul.addr %s477, 4
        %s479 = scalar_lea.vmem [#allocation2], %s478
        // Predicated region
        $region57: #{tpu_custom_call.1} parent=55 // pred_check
          %p480 = pneg %p72
        $region58: #{tpu_custom_call.1} parent=55 // pred_check_branch
          %482 = sbr.rel (%p480) target = $region60
        $region59: #{tpu_custom_call.1} parent=55 // pred_region
          %484 = dma.done %s476, 64
        $region60: #{tpu_custom_call.1} parent=55 // pred_fallthru
          _
        %s485 = sand.u32 %s37, 1
        %s486 = scalar_lea.sflag [#allocation6], %s485
        %s487 = sand.u32 %s87, 1
        %s488 = smul.addr %s487, 4
        %s489 = scalar_lea.vmem [#allocation5], %s488
        // Predicated region
        $region61: #{tpu_custom_call.1} parent=55 // pred_check
          %p490 = pneg %p100
        $region62: #{tpu_custom_call.1} parent=55 // pred_check_branch
          %492 = sbr.rel (%p490) target = $region64
        $region63: #{tpu_custom_call.1} parent=55 // pred_region
          %494 = dma.done %s486, 64
        $region64: #{tpu_custom_call.1} parent=55 // pred_fallthru
          _
        %s495 = sand.u32 %s37, 1
        %s496 = scalar_lea.sflag [#allocation6], %s495
        %s497 = sand.u32 %s115, 1
        %s498 = smul.addr %s497, 4
        %s499 = scalar_lea.vmem [#allocation7], %s498
        // Predicated region
        $region65: #{tpu_custom_call.1} parent=55 // pred_check
          %p500 = pneg %p128
        $region66: #{tpu_custom_call.1} parent=55 // pred_check_branch
          %502 = sbr.rel (%p500) target = $region68
        $region67: #{tpu_custom_call.1} parent=55 // pred_region
          %504 = dma.done %s496, 64
        $region68: #{tpu_custom_call.1} parent=55 // pred_fallthru
          _
        // Predicated region
        $region69: #{tpu_custom_call.1} parent=55 // pred_check
          %p505 = pneg %p149
        $region70: #{tpu_custom_call.1} parent=55 // pred_check_branch
          %507 = sbr.rel (%p505) target = $region72
        $region71: #{tpu_custom_call.1} parent=55 // pred_region
          %509 = dma.done [#allocation9], 256
        $region72: #{tpu_custom_call.1} parent=55 // pred_fallthru
          _
        // Predicated region
        $region73: #{tpu_custom_call.1} parent=55 // pred_check
          %p510 = pneg %p191
        $region74: #{tpu_custom_call.1} parent=55 // pred_check_branch
          %512 = sbr.rel (%p510) target = $region76
        $region75: #{tpu_custom_call.1} parent=55 // pred_region
          %514 = dma.done [#allocation9], 256
        $region76: #{tpu_custom_call.1} parent=55 // pred_fallthru
          _
        // Predicated region
        $region77: #{tpu_custom_call.1} parent=55 // pred_check
          %p515 = pneg %p233
        $region78: #{tpu_custom_call.1} parent=55 // pred_check_branch
          %517 = sbr.rel (%p515) target = $region80
        $region79: #{tpu_custom_call.1} parent=55 // pred_region
          %519 = dma.done [#allocation12], 256
        $region80: #{tpu_custom_call.1} parent=55 // pred_fallthru
          _
        %s520 = sand.u32 %s59, 1
        %s521 = scalar_lea.sflag [#allocation3], %s520
        %s522 = sand.u32 %s59, 1
        %s523 = smul.addr %s522, 4
        %s524 = scalar_lea.vmem [#allocation2], %s523
        %p525 = pneg %p72
        %p526 = pneg %p69
        %s527 = sand.u32 %s37, 1
        %s528 = scalar_lea.sflag [#allocation6], %s527
        %s529 = sand.u32 %s87, 1
        %s530 = smul.addr %s529, 4
        %s531 = scalar_lea.vmem [#allocation5], %s530
        %p532 = pneg %p100
        %p533 = pneg %p97
        %s534 = sand.u32 %s37, 1
        %s535 = scalar_lea.sflag [#allocation6], %s534
        %s536 = sand.u32 %s115, 1
        %s537 = smul.addr %s536, 4
        %s538 = scalar_lea.vmem [#allocation7], %s537
        %p539 = pneg %p128
        %p540 = pneg %p125
        %p541 = pneg %p149
        %p542 = pneg %p146
        %p543 = pneg %p170
        %p544 = pneg %p167
        %p545 = pneg %p191
        %p546 = pneg %p188
        %p547 = pneg %p212
        %p548 = pneg %p209
        %p549 = pneg %p233
        %p550 = pneg %p230
        %p551 = pneg %p254
        %p552 = pneg %p251
        %p553 = pneg %p282
        %p554 = pneg %p279
        %s555 = sand.u32 %s269, 1
        %s556 = scalar_lea.sflag [#allocation4], %s555
        %s557 = sand.u32 %s269, 1
        %s558 = smul.addr %s557, 4
        %s559 = scalar_lea.vmem [#allocation13], %s558
        %p560 = pneg %p310
        %p561 = pneg %p307
        %s562 = sand.u32 %s37, 1
        %s563 = scalar_lea.sflag [#allocation15], %s562
        %s564 = sand.u32 %s297, 1
        %s565 = smul.addr %s564, 4
        %s566 = scalar_lea.vmem [#allocation14], %s565
        %p567 = pneg %p338
        %p568 = pneg %p335
        %s569 = sand.u32 %s37, 1
        %s570 = scalar_lea.sflag [#allocation15], %s569
        %s571 = sand.u32 %s325, 1
        %s572 = smul.addr %s571, 4
        %s573 = scalar_lea.vmem [#allocation16], %s572
        %v575 = vld [vmem:[%s479] sm:$0xf]
        %v576 = vld [vmem:[#allocation8] sm:$0xf]
        %v577 = vld [vmem:[#allocation8 + $0x4] sm:$0xf]
        %v578 = vld [vmem:[#allocation8 + $0x8] sm:$0xf]
        %v579 = vld [vmem:[#allocation8 + $0xc] sm:$0xf]
        %v580 = vld [vmem:[%s4] sm:$0x1]
        %v582 = vperm.slane %v580, 0
        %v588 = vunpack.c.l.b16 %v576
        %v589 = vunpack.c.l.b16 %v577
        %v590 = vunpack.c.l.b16 %v578
        %v591 = vunpack.c.l.b16 %v579
        %v592 = vpack.c.b16 %v589, %v588
        %v593 = vpack.c.b16 %v591, %v590
        %vm596 = vcmask 261120
        %v598 = vsel %vm596, %v575, 0
        %600 = vmatpush.bf16.msra.mxu0 0
        %601 = vmatpush.bf16.msra.mxu0 0
        %602 = vmatpush.bf16.msra.mxu0 0
        %603 = vmatpush.bf16.msra.mxu0 0
        %604 = vmatpush.bf16.msra.mxu0 0
        %605 = vmatpush.bf16.msra.mxu0 0
        %606 = vmatpush.bf16.msra.mxu0 %v593
        %607 = vmatpush.bf16.msra.mxu0 %v592
        %608 = vmatmul.bf16.gmra.mxu0 %v598
        %v609 = vpop.f32.mrf.mxu0
        %v610 = vadd.f32 %v582, %v609
        %v611 = vpop.f32.mrf.mxu0
        %612 = vdwg.mxu0
        %v613 = vpack.c.bf16 %v610, %v610
        %vm614 = vcmask 257024
        %615 = vst.msk [vmem:[%s559] sm:$0xf] %vm614, %v613
        %v616 = vld [vmem:[%s489] sm:$0xf]
        %v617 = vld [vmem:[#allocation10] sm:$0xf]
        %v618 = vld [vmem:[#allocation10 + $0x4] sm:$0xf]
        %v619 = vld [vmem:[#allocation10 + $0x8] sm:$0xf]
        %v620 = vld [vmem:[#allocation10 + $0xc] sm:$0xf]
        %v621 = vld [vmem:[%s6] sm:$0x1]
        %v623 = vperm.slane %v621, 0
        %v629 = vunpack.c.l.b16 %v617
        %v630 = vunpack.c.l.b16 %v618
        %v631 = vunpack.c.l.b16 %v619
        %v632 = vunpack.c.l.b16 %v620
        %v633 = vpack.c.b16 %v630, %v629
        %v634 = vpack.c.b16 %v632, %v631
        %v638 = vsel %vm596, %v616, 0
        %640 = vmatpush.bf16.msra.mxu0 0
        %641 = vmatpush.bf16.msra.mxu0 0
        %642 = vmatpush.bf16.msra.mxu0 0
        %643 = vmatpush.bf16.msra.mxu0 0
        %644 = vmatpush.bf16.msra.mxu0 0
        %645 = vmatpush.bf16.msra.mxu0 0
        %646 = vmatpush.bf16.msra.mxu0 %v634
        %647 = vmatpush.bf16.msra.mxu0 %v633
        %648 = vmatmul.bf16.gmra.mxu0 %v638
        %v649 = vpop.f32.mrf.mxu0
        %v650 = vadd.f32 %v623, %v649
        %v651 = vpop.f32.mrf.mxu0
        %652 = vdwg.mxu0
        %v653 = vpack.c.bf16 %v650, %v650
        %654 = vst.msk [vmem:[%s566] sm:$0xf] %vm614, %v653
        %v655 = vld [vmem:[%s499] sm:$0xf]
        %v656 = vld [vmem:[#allocation11] sm:$0xf]
        %v657 = vld [vmem:[#allocation11 + $0x4] sm:$0xf]
        %v658 = vld [vmem:[#allocation11 + $0x8] sm:$0xf]
        %v659 = vld [vmem:[#allocation11 + $0xc] sm:$0xf]
        %v660 = vld [vmem:[%s8] sm:$0x1]
        %v662 = vperm.slane %v660, 0
        %v668 = vunpack.c.l.b16 %v656
        %v669 = vunpack.c.l.b16 %v657
        %v670 = vunpack.c.l.b16 %v658
        %v671 = vunpack.c.l.b16 %v659
        %v672 = vpack.c.b16 %v669, %v668
        %v673 = vpack.c.b16 %v671, %v670
        %v677 = vsel %vm596, %v655, 0
        %679 = vmatpush.bf16.msra.mxu0 0
        %680 = vmatpush.bf16.msra.mxu0 0
        %681 = vmatpush.bf16.msra.mxu0 0
        %682 = vmatpush.bf16.msra.mxu0 0
        %683 = vmatpush.bf16.msra.mxu0 0
        %684 = vmatpush.bf16.msra.mxu0 0
        %685 = vmatpush.bf16.msra.mxu0 %v673
        %686 = vmatpush.bf16.msra.mxu0 %v672
        %687 = vmatmul.bf16.gmra.mxu0 %v677
        %v688 = vpop.f32.mrf.mxu0
        %v689 = vadd.f32 %v662, %v688
        %v690 = vpop.f32.mrf.mxu0
        %691 = vdwg.mxu0
        %v692 = vpack.c.bf16 %v689, %v689
        %693 = vst.msk [vmem:[%s573] sm:$0xf] %vm614, %v692
        %s694 = sand.u32 %s269, 1
        %s695 = scalar_lea.sflag [#allocation4], %s694
        %s696 = sand.u32 %s269, 1
        %s697 = smul.addr %s696, 4
        %s698 = scalar_lea.vmem [#allocation13], %s697
        %s699 = sand.u32 %s37, 1
        %s700 = scalar_lea.sflag [#allocation15], %s699
        %s701 = sand.u32 %s297, 1
        %s702 = smul.addr %s701, 4
        %s703 = scalar_lea.vmem [#allocation14], %s702
        %s704 = sand.u32 %s37, 1
        %s705 = scalar_lea.sflag [#allocation15], %s704
        %s706 = sand.u32 %s325, 1
        %s707 = smul.addr %s706, 4
        %s708 = scalar_lea.vmem [#allocation16], %s707
        // Predicated region
        $region81: #{tpu_custom_call.1} parent=55 // pred_check
          %p709 = pneg %p279
        $region82: #{tpu_custom_call.1} parent=55 // pred_check_branch
          %711 = sbr.rel (%p709) target = $region84
        $region83: #{tpu_custom_call.1} parent=55 // pred_region
          %713 = vsyncadd %s695, 0
          %s714 = sadd.s32 %s42, %s41
          %s715 = smul.addr %s714, 4
          %s716 = scalar_lea.hbm %s9, %s715
          %s718 = sshll.u32 %s698, 4
          %s719 = int_to_ptr.vmem [resolvable:$true] %s718
          %s720 = sshll.u32 %s716, 4
          %s721 = int_to_ptr.hbm [resolvable:$true] %s720
          %723 = dma.vmem_to_hbm [thread:$0]  %s719, 64, %s721, %s695
        $region84: #{tpu_custom_call.1} parent=55 // pred_fallthru
          _
        // Predicated region
        $region85: #{tpu_custom_call.1} parent=55 // pred_check
          %p724 = pneg %p307
        $region86: #{tpu_custom_call.1} parent=55 // pred_check_branch
          %726 = sbr.rel (%p724) target = $region88
        $region87: #{tpu_custom_call.1} parent=55 // pred_region
          %728 = vsyncadd %s700, 0
          %s729 = sadd.s32 %s42, %s41
          %s730 = smul.addr %s729, 4
          %s731 = scalar_lea.hbm %s10, %s730
          %s733 = sshll.u32 %s703, 4
          %s734 = int_to_ptr.vmem [resolvable:$true] %s733
          %s735 = sshll.u32 %s731, 4
          %s736 = int_to_ptr.hbm [resolvable:$true] %s735
          %738 = dma.vmem_to_hbm [thread:$0]  %s734, 64, %s736, %s700
        $region88: #{tpu_custom_call.1} parent=55 // pred_fallthru
          _
        // Predicated region
        $region89: #{tpu_custom_call.1} parent=55 // pred_check
          %p739 = pneg %p335
        $region90: #{tpu_custom_call.1} parent=55 // pred_check_branch
          %741 = sbr.rel (%p739) target = $region92
        $region91: #{tpu_custom_call.1} parent=55 // pred_region
          %743 = vsyncadd %s705, 0
          %s744 = sadd.s32 %s42, %s41
          %s745 = smul.addr %s744, 4
          %s746 = scalar_lea.hbm %s11, %s745
          %s748 = sshll.u32 %s708, 4
          %s749 = int_to_ptr.vmem [resolvable:$true] %s748
          %s750 = sshll.u32 %s746, 4
          %s751 = int_to_ptr.hbm [resolvable:$true] %s750
          %753 = dma.vmem_to_hbm [thread:$0]  %s749, 64, %s751, %s705
        $region92: #{tpu_custom_call.1} parent=55 // pred_fallthru
          _
      $region56: #{tpu_custom_call.1} parent=5 // pred_fallthru
        _
      %p754 = scmp.le.s32.totalorder 2, %s32
      // Predicated region
      $region93: #{tpu_custom_call.1} parent=5 // pred_check
        %p755 = pneg %p754
      $region94: #{tpu_custom_call.1} parent=5 // pred_check_branch
        %757 = sbr.rel (%p755) target = $region96
      $region95: #{tpu_custom_call.1} parent=5 // pred_region
        %s758 = ssub.s32 %s32, 2
        // Predicated region
        $region97: #{tpu_custom_call.1} parent=95 // pred_check
          %p759 = pneg %p285
        $region98: #{tpu_custom_call.1} parent=95 // pred_check_branch
          %761 = sbr.rel (%p759) target = $region100
        $region99: #{tpu_custom_call.1} parent=95 // pred_region
          %s762 = sand.u32 %s270, 1
          %s763 = scalar_lea.sflag [#allocation4], %s762
          %s764 = sand.u32 %s270, 1
          %s765 = smul.addr %s764, 4
          %s766 = scalar_lea.vmem [#allocation13], %s765
          %768 = dma.done %s763, 64
        $region100: #{tpu_custom_call.1} parent=95 // pred_fallthru
          _
        // Predicated region
        $region101: #{tpu_custom_call.1} parent=95 // pred_check
          %p769 = pneg %p313
        $region102: #{tpu_custom_call.1} parent=95 // pred_check_branch
          %771 = sbr.rel (%p769) target = $region104
        $region103: #{tpu_custom_call.1} parent=95 // pred_region
          %s772 = sand.u32 %s38, 1
          %s773 = scalar_lea.sflag [#allocation15], %s772
          %s774 = sand.u32 %s298, 1
          %s775 = smul.addr %s774, 4
          %s776 = scalar_lea.vmem [#allocation14], %s775
          %778 = dma.done %s773, 64
        $region104: #{tpu_custom_call.1} parent=95 // pred_fallthru
          _
        // Predicated region
        $region105: #{tpu_custom_call.1} parent=95 // pred_check
          %p779 = pneg %p341
        $region106: #{tpu_custom_call.1} parent=95 // pred_check_branch
          %781 = sbr.rel (%p779) target = $region108
        $region107: #{tpu_custom_call.1} parent=95 // pred_region
          %s782 = sand.u32 %s38, 1
          %s783 = scalar_lea.sflag [#allocation15], %s782
          %s784 = sand.u32 %s326, 1
          %s785 = smul.addr %s784, 4
          %s786 = scalar_lea.vmem [#allocation16], %s785
          %788 = dma.done %s783, 64
        $region108: #{tpu_custom_call.1} parent=95 // pred_fallthru
          _
      $region96: #{tpu_custom_call.1} parent=5 // pred_fallthru
        _
    $region6: #{tpu_custom_call.1} parent=1 // loop_footer
      %s36 = sadd.s32 1, %s32
    $region7: #{tpu_custom_call.1} parent=1 // loop_footer_branch
      %31 = sbr.rel target = $region3
    $region8: #{tpu_custom_call.1} parent=1 // loop_exit
      _
    %789 = vsyncpa [#allocation3], 1
    %s790 = scalar_lea.sflag [#allocation3], 1
    %791 = vsyncpa %s790, 1
    %792 = vsyncpa [#allocation6], 1
    %s793 = scalar_lea.sflag [#allocation6], 1
    %794 = vsyncpa %s793, 1
    %795 = vsyncpa [#allocation9], 1
    %796 = vsyncpa [#allocation12], 1
    %797 = vsyncpa [#allocation4], 1
    %s798 = scalar_lea.sflag [#allocation4], 1
    %799 = vsyncpa %s798, 1
    %800 = vsyncpa [#allocation15], 1
    %s801 = scalar_lea.sflag [#allocation15], 1
    %802 = vsyncpa %s801, 1

</llo_original>
